<compile_context>
chip_gen: v5e
topology: v5e:2x2
jax: 0.10.0
libtpu: 0.0.40
codegen_flags: <defaults>
</compile_context>

<pallas_src>
import numpy as np

import jax
import jax.numpy as jnp
from jax.experimental import pallas as pl
from jax.experimental.pallas import tpu as pltpu


def _make_kernel(std, mean):
    """Build the kernel with mean/std baked in as compile-time constants."""
    s0, s1, s2, s3 = (float(v) for v in std)
    m0, m1, m2, m3 = (float(v) for v in mean)
    mean_is_zero = (m0 == 0.0 and m1 == 0.0 and m2 == 0.0 and m3 == 0.0)

    def kernel(boxes_ref, deltas_ref, out_ref):
        # (TR, 128) tiles; each row = 32 boxes laid out [x1,y1,x2,y2]*32.
        boxes = boxes_ref[...].astype(jnp.float32)
        deltas = deltas_ref[...].astype(jnp.float32)

        lane = jax.lax.broadcasted_iota(jnp.int32, boxes.shape, 1)
        is_first = (lane & 3) < 2        # lanes holding x1/y1 (and dx/dy)
        is_x = (lane & 1) == 0           # x-coordinate lanes (x1/x2, dx/dw)

        # XLU lane rotations (positive shifts only):
        #   roll(x, 126)[i] = x[i+2 mod 128]   (bring the "second pair" down)
        #   roll(x,   2)[i] = x[i-2 mod 128]   (bring the "first pair" up)
        b_m2 = pltpu.roll(boxes, shift=126, axis=1)
        b_p2 = pltpu.roll(boxes, shift=2, axis=1)
        d_m2 = pltpu.roll(deltas, shift=126, axis=1)
        d_p2 = pltpu.roll(deltas, shift=2, axis=1)

        # Realign so every lane holds the quantity it needs for its own box.
        # Wrapped lanes (i<2 for roll+2, i>=126 for roll-2) always fall in the
        # branch the select discards, so no extra masking is required.
        wh = jnp.where(is_first, b_m2 - boxes, boxes - b_p2)   # w/h everywhere
        xy1 = jnp.where(is_first, boxes, b_p2)                 # x1/y1 everywhere
        dxy = jnp.where(is_first, deltas, d_p2)                # dx/dy everywhere
        dwh = jnp.where(is_first, d_m2, deltas)                # dw/dh everywhere

        # De-normalize with baked-in per-coordinate std/mean.
        dxy = dxy * jnp.where(is_x, s0, s1)
        dwh = dwh * jnp.where(is_x, s2, s3)
        if not mean_is_zero:
            dxy = dxy + jnp.where(is_x, m0, m1)
            dwh = dwh + jnp.where(is_x, m2, m3)

        ctr = xy1 + 0.5 * wh
        pred_ctr = ctr + dxy * wh
        half = 0.5 * (jnp.exp(dwh) * wh)

        # x1'/y1' on the first-pair lanes, x2'/y2' on the second-pair lanes:
        # exactly the interleaved output layout, stored full-width.
        out = jnp.where(is_first, pred_ctr - half, pred_ctr + half)
        out_ref[...] = out.astype(out_ref.dtype)

    return kernel


def bbox_transform(boxes, deltas, mean=None, std=None, *, block_rows=4096):
    """boxes, deltas: (B, N, 4) -> pred_boxes: (B, N, 4) float32."""
    if mean is None:
        mean = np.zeros(4, np.float32)
    if std is None:
        std = np.array([0.1, 0.1, 0.2, 0.2], np.float32)
    # mean/std are module parameters -> treated as compile-time constants.
    # (They must be concrete here, matching the nn.Module constructor.)
    mean = np.asarray(mean, np.float32).reshape(4)
    std = np.asarray(std, np.float32).reshape(4)

    B, N, C = boxes.shape
    assert C == 4 and deltas.shape == boxes.shape, "boxes/deltas must be (B,N,4)"

    # Pad N to a multiple of 32 boxes so N*4 is a multiple of 128 lanes.
    # Zero pad boxes/deltas are benign (w=h=0 -> output 0); sliced off below.
    pad = (-N) % 32
    if pad:
        boxes = jnp.pad(boxes, ((0, 0), (0, pad), (0, 0)))
        deltas = jnp.pad(deltas, ((0, 0), (0, pad), (0, 0)))
    n_pad = N + pad

    # Free row-major reshape to the lane-dense layout: (B*n_pad/32, 128).
    rows = (B * n_pad) // 32
    boxes_f = boxes.reshape(rows, 128)
    deltas_f = deltas.reshape(rows, 128)

    # Tile selection: big enough to amortize per-step overhead, multiple of 8
    # on the sublane axis, small enough for VMEM on v7x, and with enough grid
    # steps (~8) to feed both v7x TensorCores via the "parallel" axis.
    tr = max(8, (min(int(block_rows), 4096) // 8) * 8)
    tr = min(tr, rows)
    if tr < rows:
        cap = max(512, -(-rows // 8))        # ~8 grid steps
        cap = (-(-cap // 8)) * 8             # round up to a multiple of 8
        tr = min(tr, cap)
    grid = (pl.cdiv(rows, tr),)

    kernel = _make_kernel(std, mean)

    out = pl.pallas_call(
        kernel,
        out_shape=jax.ShapeDtypeStruct((rows, 128), jnp.float32),
        grid=grid,
        in_specs=[
            pl.BlockSpec((tr, 128), lambda i: (i, 0)),   # boxes
            pl.BlockSpec((tr, 128), lambda i: (i, 0)),   # deltas
        ],
        out_specs=pl.BlockSpec((tr, 128), lambda i: (i, 0)),
        compiler_params=pltpu.CompilerParams(
            dimension_semantics=("parallel",),
            # 12 MiB of double-buffered blocks at tr=4096 plus temporaries;
            # explicit limit covers v5e's 16 MiB scoped default and stays
            # safely under v7x's 64 MiB physical VMEM.
            vmem_limit_bytes=48 << 20,
        ),
    )(boxes_f, deltas_f)

    out = out.reshape(B, n_pad, 4)
    if pad:
        out = out[:, :N, :]
    return out


def _bbox_transform_ref(boxes, deltas, mean, std):
    boxes = boxes.astype(jnp.float32)
    deltas = deltas.astype(jnp.float32)
    widths = boxes[:, :, 2] - boxes[:, :, 0]
    heights = boxes[:, :, 3] - boxes[:, :, 1]
    ctr_x = boxes[:, :, 0] + 0.5 * widths
    ctr_y = boxes[:, :, 1] + 0.5 * heights
    dx = deltas[:, :, 0] * std[0] + mean[0]
    dy = deltas[:, :, 1] * std[1] + mean[1]
    dw = deltas[:, :, 2] * std[2] + mean[2]
    dh = deltas[:, :, 3] * std[3] + mean[3]
    pred_ctr_x = ctr_x + dx * widths
    pred_ctr_y = ctr_y + dy * heights
    pred_w = jnp.exp(dw) * widths
    pred_h = jnp.exp(dh) * heights
    return jnp.stack(
        [pred_ctr_x - 0.5 * pred_w, pred_ctr_y - 0.5 * pred_h,
         pred_ctr_x + 0.5 * pred_w, pred_ctr_y + 0.5 * pred_h], axis=2)


def _make_inputs(key, B, N):
    k1, k2, k3 = jax.random.split(key, 3)
    xy1 = jax.random.uniform(k1, (B, N, 2), jnp.float32, 0.0, 50.0)
    wh = jax.random.uniform(k2, (B, N, 2), jnp.float32, 1.0, 20.0)
    boxes = jnp.concatenate([xy1, xy1 + wh], axis=2)          # x2 > x1, y2 > y1
    deltas = 0.1 * jax.random.normal(k3, (B, N, 4), jnp.float32)
    return boxes, deltas


if __name__ == "__main__":
    key = jax.random.PRNGKey(0)
    mean = np.array([0.0, 0.0, 0.0, 0.0], np.float32)
    std = np.array([0.1, 0.1, 0.2, 0.2], np.float32)

    # Case 1: N a multiple of 32 (pure lane-dense path), default mean/std.
    kA, kB = jax.random.split(key)
    boxes, deltas = _make_inputs(kA, 2, 256)
    out = jax.block_until_ready(bbox_transform(boxes, deltas))
    ref = _bbox_transform_ref(boxes, deltas, mean, std)
    assert out.shape == (2, 256, 4)
    assert jnp.allclose(out, ref, atol=1e-4, rtol=1e-5)

    # Case 2: ragged N (exercises the pad-to-32 path) with explicit mean/std.
    boxes2, deltas2 = _make_inputs(kB, 2, 100)
    out2 = jax.block_until_ready(bbox_transform(boxes2, deltas2, mean, std))
    ref2 = _bbox_transform_ref(boxes2, deltas2, mean, std)
    assert out2.shape == (2, 100, 4)
    assert jnp.allclose(out2, ref2, atol=1e-4, rtol=1e-5)

    print("KERNEL_OK")
</pallas_src>

<mosaic_0001>
module attributes {stable_mosaic.version = 11 : i64} {
  func.func @kernel(%arg0: i32, %arg1: memref<16x128xf32, #tpu.memory_space<vmem>>, %arg2: memref<16x128xf32, #tpu.memory_space<vmem>>, %arg3: memref<16x128xf32, #tpu.memory_space<vmem>>) attributes {dimension_semantics = [#tpu.dimension_semantics<parallel>], iteration_bounds = array<i64: 1>, scalar_prefetch = 0 : i64, scratch_operands = 0 : i64, tpu.core_type = #tpu.core_type<tc>, window_params = [{transform_indices = @transform_0, window_bounds = array<i64: 16, 128>}, {transform_indices = @transform_1, window_bounds = array<i64: 16, 128>}, {transform_indices = @transform_2, window_bounds = array<i64: 16, 128>}]} {
    %c0 = arith.constant 0 : index
    %c0_0 = arith.constant 0 : index
    %0 = vector.load %arg1[%c0, %c0_0] : memref<16x128xf32, #tpu.memory_space<vmem>>, vector<16x128xf32>
    %c0_1 = arith.constant 0 : index
    %c0_2 = arith.constant 0 : index
    %1 = vector.load %arg2[%c0_1, %c0_2] : memref<16x128xf32, #tpu.memory_space<vmem>>, vector<16x128xf32>
    %2 = tpu.iota {dimensions = array<i32: 1>} : vector<16x128xi32>
    %c3_i32 = arith.constant 3 : i32
    %3 = vector.broadcast %c3_i32 : i32 to vector<16x128xi32>
    %4 = arith.andi %2, %3 : vector<16x128xi32>
    %c2_i32 = arith.constant 2 : i32
    %5 = vector.broadcast %c2_i32 : i32 to vector<16x128xi32>
    %6 = arith.cmpi slt, %4, %5 : vector<16x128xi32>
    %c1_i32 = arith.constant 1 : i32
    %7 = vector.broadcast %c1_i32 : i32 to vector<16x128xi32>
    %8 = arith.andi %2, %7 : vector<16x128xi32>
    %c0_i32 = arith.constant 0 : i32
    %9 = vector.broadcast %c0_i32 : i32 to vector<16x128xi32>
    %10 = arith.cmpi eq, %8, %9 : vector<16x128xi32>
    %c126_i32 = arith.constant 126 : i32
    %11 = tpu.dynamic_rotate %0 by %c126_i32 dim 1 : vector<16x128xf32>, i32 -> vector<16x128xf32>
    %c2_i32_3 = arith.constant 2 : i32
    %12 = tpu.dynamic_rotate %0 by %c2_i32_3 dim 1 : vector<16x128xf32>, i32 -> vector<16x128xf32>
    %c126_i32_4 = arith.constant 126 : i32
    %13 = tpu.dynamic_rotate %1 by %c126_i32_4 dim 1 : vector<16x128xf32>, i32 -> vector<16x128xf32>
    %c2_i32_5 = arith.constant 2 : i32
    %14 = tpu.dynamic_rotate %1 by %c2_i32_5 dim 1 : vector<16x128xf32>, i32 -> vector<16x128xf32>
    %15 = arith.subf %11, %0 : vector<16x128xf32>
    %16 = arith.subf %0, %12 : vector<16x128xf32>
    %17 = arith.select %6, %15, %16 : vector<16x128xi1>, vector<16x128xf32>
    %18 = arith.select %6, %0, %12 : vector<16x128xi1>, vector<16x128xf32>
    %19 = arith.select %6, %1, %14 : vector<16x128xi1>, vector<16x128xf32>
    %20 = arith.select %6, %13, %1 : vector<16x128xi1>, vector<16x128xf32>
    %cst = arith.constant 1.000000e-01 : f32
    %cst_6 = arith.constant 1.000000e-01 : f32
    %21 = vector.broadcast %cst : f32 to vector<16x128xf32>
    %22 = vector.broadcast %cst_6 : f32 to vector<16x128xf32>
    %23 = arith.select %10, %21, %22 : vector<16x128xi1>, vector<16x128xf32>
    %24 = arith.mulf %19, %23 : vector<16x128xf32>
    %cst_7 = arith.constant 2.000000e-01 : f32
    %cst_8 = arith.constant 2.000000e-01 : f32
    %25 = vector.broadcast %cst_7 : f32 to vector<16x128xf32>
    %26 = vector.broadcast %cst_8 : f32 to vector<16x128xf32>
    %27 = arith.select %10, %25, %26 : vector<16x128xi1>, vector<16x128xf32>
    %28 = arith.mulf %20, %27 : vector<16x128xf32>
    %cst_9 = arith.constant 5.000000e-01 : f32
    %29 = vector.broadcast %cst_9 : f32 to vector<16x128xf32>
    %30 = arith.mulf %29, %17 : vector<16x128xf32>
    %31 = arith.addf %18, %30 : vector<16x128xf32>
    %32 = arith.mulf %24, %17 : vector<16x128xf32>
    %33 = arith.addf %31, %32 : vector<16x128xf32>
    %34 = math.exp %28 : vector<16x128xf32>
    %35 = arith.mulf %34, %17 : vector<16x128xf32>
    %cst_10 = arith.constant 5.000000e-01 : f32
    %36 = vector.broadcast %cst_10 : f32 to vector<16x128xf32>
    %37 = arith.mulf %36, %35 : vector<16x128xf32>
    %38 = arith.subf %33, %37 : vector<16x128xf32>
    %39 = arith.addf %33, %37 : vector<16x128xf32>
    %40 = arith.select %6, %38, %39 : vector<16x128xi1>, vector<16x128xf32>
    %c0_11 = arith.constant 0 : index
    %c0_12 = arith.constant 0 : index
    %41 = vector.load %arg3[%c0_11, %c0_12] : memref<16x128xf32, #tpu.memory_space<vmem>>, vector<16x128xf32>
    tpu.vector_store %arg3[%c0_11, %c0_12], %40 {strides = array<i32>} : memref<16x128xf32, #tpu.memory_space<vmem>>, vector<16x128xf32>,
    return
  }
  func.func @transform_0(%arg0: i32) -> (i32, i32) {
    %c0_i32 = arith.constant 0 : i32
    %c0_i32_0 = arith.constant 0 : i32
    return %arg0, %c0_i32 : i32, i32
  }
  func.func @transform_1(%arg0: i32) -> (i32, i32) {
    %c0_i32 = arith.constant 0 : i32
    %c0_i32_0 = arith.constant 0 : i32
    return %arg0, %c0_i32 : i32, i32
  }
  func.func @transform_2(%arg0: i32) -> (i32, i32) {
    %c0_i32 = arith.constant 0 : i32
    %c0_i32_0 = arith.constant 0 : i32
    return %arg0, %c0_i32 : i32, i32
  }
}

</mosaic_0001>

<llo_original>
// kernel: tpu_custom_call.1
$region0: #{tpu_custom_call.1}
  #allocation0 [shape = 'u32[]', space=smem, size = 0x4, offset = 0x4, fixed_abs, tag = 'smem constant byte address 0x4 - core index']
  #allocation1 [shape = 'u32[72,128]{1,0:T(1,128)}', space=vmem, size = 0x9000, scoped, tag = 'internal scratch']
  %s0 = inlined_call_operand.hbm [shape: f32[16,128], index: 0, kind: input, shape index: {}]
  %s1 = inlined_call_operand.hbm [shape: f32[16,128], index: 1, kind: input, shape index: {}]
  %s2 = inlined_call_operand.hbm [shape: f32[16,128], index: 2, kind: output, shape index: {}]
  %s3 = sld [smem:[#allocation0]]
  $region26: #{tpu_custom_call.1} parent=0
    _
  %s5 = ssub.s32 1, %s3
  %s6 = scalar_select 0, %s5, %s3
  $region1: #{tpu_custom_call.1} parent=0
    #allocation2 [shape = 'u8[8192]{0}', space=vmem, size = 0x2000, scoped, tag = 'input window, operand 0, single buffered']
    #allocation3 [shape = 's32[1]{0}', space=sflag, size = 0x4, scoped, tag = 'scoped memory for tpu_custom_call.1']
    #allocation4 [shape = 's32[1]{0}', space=sflag, size = 0x4, scoped, tag = 'scoped memory for tpu_custom_call.1']
    #allocation5 [shape = 'u8[8192]{0}', space=vmem, size = 0x2000, scoped, tag = 'input window, operand 1, single buffered']
    #allocation6 [shape = 's32[1]{0}', space=sflag, size = 0x4, scoped, tag = 'scoped memory for tpu_custom_call.1']
    #allocation7 [shape = 'u8[8192]{0}', space=vmem, size = 0x2000, scoped, tag = 'output window, operand 0, single buffered']
    %7 = vsyncpa [#allocation3], 0
    %8 = vsyncpa [#allocation6], 0
    %9 = vsyncpa [#allocation4], 0
    // Predicated region
    $region2: #{tpu_custom_call.1} parent=1 // pred_check
      _
    $region3: #{tpu_custom_call.1} parent=1 // pred_check_branch
      %11 = sbr.rel (0) target = $region5
    $region4: #{tpu_custom_call.1} parent=1 // pred_region
      %13 = vsyncadd [#allocation3], 0
      %s14 = sshll.u32 %s0, 4
      %s15 = int_to_ptr.hbm [resolvable:$true] %s14
      %s16 = sshll.u32 [#allocation2], 4
      %s17 = int_to_ptr.vmem [resolvable:$true] %s16
      %22 = dma.hbm_to_vmem [thread:$0]  %s15, 256, %s17, [#allocation3], 128, 128, 8
    $region5: #{tpu_custom_call.1} parent=1 // pred_fallthru
      _
    // Predicated region
    $region6: #{tpu_custom_call.1} parent=1 // pred_check
      _
    $region7: #{tpu_custom_call.1} parent=1 // pred_check_branch
      %24 = sbr.rel (0) target = $region9
    $region8: #{tpu_custom_call.1} parent=1 // pred_region
      %26 = vsyncadd [#allocation6], 0
      %s27 = sshll.u32 %s1, 4
      %s28 = int_to_ptr.hbm [resolvable:$true] %s27
      %s29 = sshll.u32 [#allocation5], 4
      %s30 = int_to_ptr.vmem [resolvable:$true] %s29
      %35 = dma.hbm_to_vmem [thread:$0]  %s28, 256, %s30, [#allocation6], 128, 128, 8
    $region9: #{tpu_custom_call.1} parent=1 // pred_fallthru
      _
    // Predicated region
    $region10: #{tpu_custom_call.1} parent=1 // pred_check
      _
    $region11: #{tpu_custom_call.1} parent=1 // pred_check_branch
      %37 = sbr.rel (0) target = $region13
    $region12: #{tpu_custom_call.1} parent=1 // pred_region
      %39 = dma.done [#allocation3], 256
    $region13: #{tpu_custom_call.1} parent=1 // pred_fallthru
      _
    // Predicated region
    $region14: #{tpu_custom_call.1} parent=1 // pred_check
      _
    $region15: #{tpu_custom_call.1} parent=1 // pred_check_branch
      %41 = sbr.rel (0) target = $region17
    $region16: #{tpu_custom_call.1} parent=1 // pred_region
      %43 = dma.done [#allocation6], 256
    $region17: #{tpu_custom_call.1} parent=1 // pred_fallthru
      _
    %v44 = vld [vmem:[#allocation2] sm:$0xff]
    %v45 = vld [vmem:[#allocation2 + $0x8] sm:$0xff]
    %v46 = vld [vmem:[#allocation5] sm:$0xff]
    %v47 = vld [vmem:[#allocation5 + $0x8] sm:$0xff]
    %v48 = vlaneseq
    %v49 = vand.u32 %v48, 127
    %v50 = vand.u32 %v49, 3
    %vm51 = vcmp.lt.s32.totalorder %v50, 2
    %52 = vrot.lane.b32.xlu0 %v44, 126
    %v53 = vpop.permute.xlu0 %52
    %54 = vrot.lane.b32.xlu0 %v45, 126
    %v55 = vpop.permute.xlu0 %54
    %56 = vrot.lane.b32.xlu0 %v44, 2
    %v57 = vpop.permute.xlu0 %56
    %58 = vrot.lane.b32.xlu0 %v45, 2
    %v59 = vpop.permute.xlu0 %58
    %60 = vrot.lane.b32.xlu0 %v46, 126
    %v61 = vpop.permute.xlu0 %60
    %62 = vrot.lane.b32.xlu0 %v47, 126
    %v63 = vpop.permute.xlu0 %62
    %64 = vrot.lane.b32.xlu0 %v46, 2
    %v65 = vpop.permute.xlu0 %64
    %66 = vrot.lane.b32.xlu0 %v47, 2
    %v67 = vpop.permute.xlu0 %66
    %v68 = vsub.f32 %v53, %v44
    %v69 = vsub.f32 %v55, %v45
    %v70 = vsub.f32 %v44, %v57
    %v71 = vsub.f32 %v45, %v59
    %v72 = vsel %vm51, %v68, %v70
    %v73 = vsel %vm51, %v69, %v71
    %v74 = vsel %vm51, %v44, %v57
    %v75 = vsel %vm51, %v45, %v59
    %v76 = vsel %vm51, %v46, %v65
    %v77 = vsel %vm51, %v47, %v67
    %v78 = vsel %vm51, %v61, %v46
    %v79 = vsel %vm51, %v63, %v47
    %v80 = vmul.f32 %v76, 0.1
    %v81 = vmul.f32 %v77, 0.1
    %v82 = vmul.f32 %v78, 0.2
    %v83 = vmul.f32 %v79, 0.2
    %v84 = vmul.f32 %v72, 0.5
    %v85 = vmul.f32 %v73, 0.5
    %v86 = vadd.f32 %v74, %v84
    %v87 = vadd.f32 %v75, %v85
    %v88 = vmul.f32 %v80, %v72
    %v89 = vmul.f32 %v81, %v73
    %v90 = vadd.f32 %v86, %v88
    %v91 = vadd.f32 %v87, %v89
    %v92 = vmul.f32 %v82, 1.442695
    %v93 = vpow.pop %v92
    %v94 = vmul.f32 %v83, 1.442695
    %v95 = vpow.pop %v94
    %v96 = vmul.f32 %v93, %v72
    %v97 = vmul.f32 %v95, %v73
    %v98 = vmul.f32 %v96, 0.5
    %v99 = vmul.f32 %v97, 0.5
    %v100 = vsub.f32 %v90, %v98
    %v101 = vsub.f32 %v91, %v99
    %v102 = vadd.f32 %v90, %v98
    %v103 = vadd.f32 %v91, %v99
    %v104 = vsel %vm51, %v100, %v102
    %v105 = vsel %vm51, %v101, %v103
    %106 = vst [vmem:[#allocation7] sm:$0xff] %v104
    %107 = vst [vmem:[#allocation7 + $0x8] sm:$0xff] %v105
    // Predicated region
    $region18: #{tpu_custom_call.1} parent=1 // pred_check
      _
    $region19: #{tpu_custom_call.1} parent=1 // pred_check_branch
      %109 = sbr.rel (0) target = $region21
    $region20: #{tpu_custom_call.1} parent=1 // pred_region
      %111 = vsyncadd [#allocation4], 0
      %s112 = sshll.u32 [#allocation7], 4
      %s113 = int_to_ptr.vmem [resolvable:$true] %s112
      %s114 = sshll.u32 %s2, 4
      %s115 = int_to_ptr.hbm [resolvable:$true] %s114
      %120 = dma.vmem_to_hbm [thread:$0]  %s113, 256, %s115, [#allocation4], 128, 128, 8
    $region21: #{tpu_custom_call.1} parent=1 // pred_fallthru
      _
    // Predicated region
    $region22: #{tpu_custom_call.1} parent=1 // pred_check
      _
    $region23: #{tpu_custom_call.1} parent=1 // pred_check_branch
      %122 = sbr.rel (0) target = $region25
    $region24: #{tpu_custom_call.1} parent=1 // pred_region
      %124 = dma.done [#allocation4], 256
    $region25: #{tpu_custom_call.1} parent=1 // pred_fallthru
      _
    %125 = vsyncpa [#allocation3], 1
    %126 = vsyncpa [#allocation6], 1
    %127 = vsyncpa [#allocation4], 1

</llo_original>
